<compile_context>
chip_gen: v7x
topology: tpu7x:2x2x1
jax: 0.10.0
libtpu: 0.0.40
codegen_flags: <defaults>
</compile_context>

<pallas_src>
import functools

import numpy as np
import jax
import jax.numpy as jnp
from jax import lax
from jax.experimental import pallas as pl
from jax.experimental.pallas import tpu as pltpu


def _noise_topk_loss_kernel(s_ref, y_ref, m_ref, z_ref, out_ref, *,
                            k, epsilon, scale, n_sample):
    """Whole forward in one kernel invocation (small shapes, full-array blocks).

    s_ref:   (B, C)    f32   scores
    y_ref:   (B, 1)    i32   labels
    m_ref:   (1, C)    f32   per-class margins m_list
    z_ref:   (S*B, C)  f32   Gaussian noise, sample-major (row r -> sample r//B,
                             batch r%B)
    out_ref: (1, 1)    f32   scalar loss
    """
    s = s_ref[...]                                   # (B, C)
    y = y_ref[...]                                   # (B, 1)
    m = m_ref[...]                                   # (1, C)
    z = z_ref[...]                                   # (S*B, C)
    B, C = s.shape
    S = n_sample

    # ---- fused one-hot gather: margins[y] - s[., y] in ONE lane reduce -----
    col = lax.broadcasted_iota(jnp.int32, (B, C), 1)
    onehot = (col == y).astype(jnp.float32)                      # (B, C)
    mc = jnp.sum((m - s) * onehot, axis=-1, keepdims=True)       # (B, 1)

    # ---- SoftTopK forward on a flat 2D (S*B, C) working set ----------------
    # s stacked S times along sublanes (layout-trivial), matching z's ordering.
    s_b = jnp.concatenate([s] * S, axis=0)                       # (S*B, C)
    work = s_b + epsilon * z                                     # (S*B, C)

    neg = jnp.float32(-3.0e38)   # large finite sentinel (avoid -inf arithmetic)
    cur_max = jnp.max(work, axis=-1, keepdims=True)              # 1st largest
    for _ in range(k):
        # Mask all elements equal to the current max (ties are measure-zero
        # with Gaussian noise), then take the next max.
        work = jnp.where(work == cur_max, neg, work)
        cur_max = jnp.max(work, axis=-1, keepdims=True)
    # cur_max: (S*B, 1) = (k+1)-th largest noised value per (sample, batch) row

    # ---- mean over the S samples via sublane-aligned slice-sum -------------
    acc = cur_max[0:B, :]
    for j in range(1, S):
        acc = acc + cur_max[j * B:(j + 1) * B, :]
    skp1 = acc * (1.0 / S)                                       # (B, 1)

    # ---- hinge + mean -------------------------------------------------------
    num = jnp.maximum(scale * (mc + skp1), 0.0)                  # (B, 1)
    out_ref[...] = jnp.sum(num, axis=0, keepdims=True) * (1.0 / B)


def imbalanced_noise_topk_loss_pallas(s, y, m_list, z_flat, *,
                                      k, epsilon, scale, n_sample):
    """z_flat is the (n_sample*B, C) row-major flattening of a (S, B, C) normal
    noise tensor (iid N(0,1), equivalent to the module's torch.randn(B, C, S))."""
    B, C = s.shape
    S = int(n_sample)
    assert z_flat.shape == (S * B, C)
    assert k + 1 <= C

    y2 = y.astype(jnp.int32).reshape(B, 1)
    m2 = m_list.astype(jnp.float32).reshape(1, C)

    kernel = functools.partial(
        _noise_topk_loss_kernel, k=int(k), epsilon=float(epsilon),
        scale=float(scale), n_sample=S)

    out = pl.pallas_call(
        kernel,
        out_shape=jax.ShapeDtypeStruct((1, 1), jnp.float32),
        in_specs=[pl.BlockSpec(memory_space=pltpu.MemorySpace.VMEM)] * 4,
        out_specs=pl.BlockSpec(memory_space=pltpu.MemorySpace.VMEM),
    )(s.astype(jnp.float32), y2, m2, z_flat.astype(jnp.float32))
    return out[0, 0]


if __name__ == "__main__":
    # ---- module hyper-parameters (ImbalancedNoiseTopKLoss.__init__) --------
    k = 2
    num_classes = 16
    cls_num_list = [100, 80, 64, 51, 41, 33, 26, 21, 17, 13, 11, 9, 7, 5, 4, 3]
    exp = 0.25
    n_sample = 8
    epsilon = 0.1
    max_m = 0.5
    scale = 30.0

    m_np = 1.0 / np.power(np.asarray(cls_num_list, np.float64), exp)
    m_np = m_np * (max_m / np.max(m_np))
    m_list = jnp.asarray(m_np, jnp.float32)

    # ---- deterministic example inputs ---------------------------------------
    B = 8
    key = jax.random.PRNGKey(0)
    ks, ky, kz = jax.random.split(key, 3)
    s = jax.random.normal(ks, (B, num_classes), jnp.float32)
    y = jax.random.randint(ky, (B,), 0, num_classes, dtype=jnp.int32)
    Z = jax.random.normal(kz, (n_sample, B, num_classes), jnp.float32)  # (S,B,C)
    Z_flat = Z.reshape(n_sample * B, num_classes)                       # (S*B,C)

    loss = imbalanced_noise_topk_loss_pallas(
        s, y, m_list, Z_flat, k=k, epsilon=epsilon, scale=scale,
        n_sample=n_sample)
    loss = jax.block_until_ready(loss)

    # ---- pure-JAX reference check (same Z) ----------------------------------
    noised = s[None, :, :] + epsilon * Z                        # (S, B, C)
    kth = jnp.sort(noised, axis=-1)[..., num_classes - (k + 1)]  # (k+1)-th largest
    skp1_ref = jnp.mean(kth, axis=0)                            # (B,)
    num_ref = jnp.maximum(
        scale * (m_list[y] + skp1_ref - s[jnp.arange(B), y]), 0.0)
    loss_ref = jnp.mean(num_ref)

    assert abs(float(loss) - float(loss_ref)) < 1e-4, (float(loss), float(loss_ref))
    print("KERNEL_OK")
</pallas_src>

<mosaic_0001>
module attributes {stable_mosaic.version = 11 : i64} {
  func.func @_noise_topk_loss_kernel(%arg0: memref<8x16xf32, #tpu.memory_space<vmem>>, %arg1: memref<8x1xi32, #tpu.memory_space<vmem>>, %arg2: memref<1x16xf32, #tpu.memory_space<vmem>>, %arg3: memref<64x16xf32, #tpu.memory_space<vmem>>, %arg4: memref<1x1xf32, #tpu.memory_space<vmem>>) attributes {dimension_semantics = [], scalar_prefetch = 0 : i64, scratch_operands = 0 : i64, tpu.core_type = #tpu.core_type<tc>} {
    %c0 = arith.constant 0 : index
    %c0_0 = arith.constant 0 : index
    %0 = vector.load %arg0[%c0, %c0_0] : memref<8x16xf32, #tpu.memory_space<vmem>>, vector<8x16xf32>
    %c0_1 = arith.constant 0 : index
    %c0_2 = arith.constant 0 : index
    %1 = vector.load %arg1[%c0_1, %c0_2] : memref<8x1xi32, #tpu.memory_space<vmem>>, vector<8x1xi32>
    %c0_3 = arith.constant 0 : index
    %c0_4 = arith.constant 0 : index
    %2 = vector.load %arg2[%c0_3, %c0_4] : memref<1x16xf32, #tpu.memory_space<vmem>>, vector<1x16xf32>
    %c0_5 = arith.constant 0 : index
    %c0_6 = arith.constant 0 : index
    %3 = vector.load %arg3[%c0_5, %c0_6] : memref<64x16xf32, #tpu.memory_space<vmem>>, vector<64x16xf32>
    %4 = tpu.iota {dimensions = array<i32: 1>} : vector<8x16xi32>
    %5 = vector.broadcast %1 : vector<8x1xi32> to vector<8x16xi32>
    %6 = arith.cmpi eq, %4, %5 : vector<8x16xi32>
    %7 = arith.extui %6 : vector<8x16xi1> to vector<8x16xi32>
    %8 = arith.sitofp %7 : vector<8x16xi32> to vector<8x16xf32>
    %9 = vector.broadcast %2 : vector<1x16xf32> to vector<8x16xf32>
    %10 = arith.subf %9, %0 : vector<8x16xf32>
    %11 = arith.mulf %10, %8 : vector<8x16xf32>
    %cst = arith.constant dense<0.000000e+00> : vector<8xf32>
    %12 = vector.multi_reduction <add>, %11, %cst [1] : vector<8x16xf32> to vector<8xf32>
    %13 = vector.shape_cast %12 : vector<8xf32> to vector<8x1xf32>
    %14 = tpu.concatenate %0, %0, %0, %0, %0, %0, %0, %0 in 0 : vector<8x16xf32>, vector<8x16xf32>, vector<8x16xf32>, vector<8x16xf32>, vector<8x16xf32>, vector<8x16xf32>, vector<8x16xf32>, vector<8x16xf32> -> vector<64x16xf32>
    %cst_7 = arith.constant 1.000000e-01 : f32
    %15 = vector.broadcast %cst_7 : f32 to vector<64x16xf32>
    %16 = arith.mulf %15, %3 : vector<64x16xf32>
    %17 = arith.addf %14, %16 : vector<64x16xf32>
    %cst_8 = arith.constant dense<0xFF800000> : vector<64xf32>
    %18 = vector.multi_reduction <maximumf>, %17, %cst_8 [1] : vector<64x16xf32> to vector<64xf32>
    %19 = vector.shape_cast %18 : vector<64xf32> to vector<64x1xf32>
    %20 = vector.broadcast %19 : vector<64x1xf32> to vector<64x16xf32>
    %21 = arith.cmpf oeq, %17, %20 : vector<64x16xf32>
    %cst_9 = arith.constant -3.000000e+38 : f32
    %22 = vector.broadcast %cst_9 : f32 to vector<64x16xf32>
    %23 = arith.select %21, %22, %17 : vector<64x16xi1>, vector<64x16xf32>
    %cst_10 = arith.constant dense<0xFF800000> : vector<64xf32>
    %24 = vector.multi_reduction <maximumf>, %23, %cst_10 [1] : vector<64x16xf32> to vector<64xf32>
    %25 = vector.shape_cast %24 : vector<64xf32> to vector<64x1xf32>
    %26 = vector.broadcast %25 : vector<64x1xf32> to vector<64x16xf32>
    %27 = arith.cmpf oeq, %23, %26 : vector<64x16xf32>
    %cst_11 = arith.constant -3.000000e+38 : f32
    %28 = vector.broadcast %cst_11 : f32 to vector<64x16xf32>
    %29 = arith.select %27, %28, %23 : vector<64x16xi1>, vector<64x16xf32>
    %cst_12 = arith.constant dense<0xFF800000> : vector<64xf32>
    %30 = vector.multi_reduction <maximumf>, %29, %cst_12 [1] : vector<64x16xf32> to vector<64xf32>
    %31 = vector.shape_cast %30 : vector<64xf32> to vector<64x1xf32>
    %32 = vector.extract_strided_slice %31 {offsets = [0, 0], sizes = [8, 1], strides = [1, 1]} : vector<64x1xf32> to vector<8x1xf32>
    %33 = vector.extract_strided_slice %31 {offsets = [8, 0], sizes = [8, 1], strides = [1, 1]} : vector<64x1xf32> to vector<8x1xf32>
    %34 = arith.addf %32, %33 : vector<8x1xf32>
    %35 = vector.extract_strided_slice %31 {offsets = [16, 0], sizes = [8, 1], strides = [1, 1]} : vector<64x1xf32> to vector<8x1xf32>
    %36 = arith.addf %34, %35 : vector<8x1xf32>
    %37 = vector.extract_strided_slice %31 {offsets = [24, 0], sizes = [8, 1], strides = [1, 1]} : vector<64x1xf32> to vector<8x1xf32>
    %38 = arith.addf %36, %37 : vector<8x1xf32>
    %39 = vector.extract_strided_slice %31 {offsets = [32, 0], sizes = [8, 1], strides = [1, 1]} : vector<64x1xf32> to vector<8x1xf32>
    %40 = arith.addf %38, %39 : vector<8x1xf32>
    %41 = vector.extract_strided_slice %31 {offsets = [40, 0], sizes = [8, 1], strides = [1, 1]} : vector<64x1xf32> to vector<8x1xf32>
    %42 = arith.addf %40, %41 : vector<8x1xf32>
    %43 = vector.extract_strided_slice %31 {offsets = [48, 0], sizes = [8, 1], strides = [1, 1]} : vector<64x1xf32> to vector<8x1xf32>
    %44 = arith.addf %42, %43 : vector<8x1xf32>
    %45 = vector.extract_strided_slice %31 {offsets = [56, 0], sizes = [8, 1], strides = [1, 1]} : vector<64x1xf32> to vector<8x1xf32>
    %46 = arith.addf %44, %45 : vector<8x1xf32>
    %cst_13 = arith.constant 1.250000e-01 : f32
    %47 = vector.broadcast %cst_13 : f32 to vector<8x1xf32>
    %48 = arith.mulf %46, %47 : vector<8x1xf32>
    %49 = arith.addf %13, %48 : vector<8x1xf32>
    %cst_14 = arith.constant 3.000000e+01 : f32
    %50 = vector.broadcast %cst_14 : f32 to vector<8x1xf32>
    %51 = arith.mulf %50, %49 : vector<8x1xf32>
    %cst_15 = arith.constant 0.000000e+00 : f32
    %52 = vector.broadcast %cst_15 : f32 to vector<8x1xf32>
    %53 = arith.maximumf %51, %52 : vector<8x1xf32>
    %cst_16 = arith.constant dense<0.000000e+00> : vector<1xf32>
    %54 = vector.multi_reduction <add>, %53, %cst_16 [0] : vector<8x1xf32> to vector<1xf32>
    %55 = vector.shape_cast %54 : vector<1xf32> to vector<1x1xf32>
    %cst_17 = arith.constant 1.250000e-01 : f32
    %56 = vector.broadcast %cst_17 : f32 to vector<1x1xf32>
    %57 = arith.mulf %55, %56 : vector<1x1xf32>
    %c0_18 = arith.constant 0 : index
    %c0_19 = arith.constant 0 : index
    %58 = vector.load %arg4[%c0_18, %c0_19] : memref<1x1xf32, #tpu.memory_space<vmem>>, vector<1x1xf32>
    tpu.vector_store %arg4[%c0_18, %c0_19], %57 {strides = array<i32>} : memref<1x1xf32, #tpu.memory_space<vmem>>, vector<1x1xf32>,
    return
  }
}

</mosaic_0001>

<llo_original>
// kernel: tpu_custom_call.1
$region0: #{tpu_custom_call.1}
  #allocation0 [shape = 'u32[]', space=smem, size = 0x4, offset = 0x4, fixed_abs, tag = 'smem constant byte address 0x4 - core index']
  #allocation1 [shape = 'u32[144,128]{1,0:T(1,128)}', space=vmem, size = 0x12000, scoped, tag = 'internal scratch']
  %s0 = inlined_call_operand.vmem [shape: f32[8,16], index: 0, kind: input, shape index: {}]
  %s1 = inlined_call_operand.vmem [shape: s32[8,1], index: 1, kind: input, shape index: {}]
  %s2 = inlined_call_operand.vmem [shape: f32[1,16], index: 2, kind: input, shape index: {}]
  %s3 = inlined_call_operand.vmem [shape: f32[64,16], index: 3, kind: input, shape index: {}]
  %s4 = inlined_call_operand.hbm [shape: f32[1,1], index: 4, kind: output, shape index: {}]
  %s5 = sld [smem:[#allocation0]]
  $region26: #{tpu_custom_call.1} parent=0
    _
  %s7 = ssub.s32 1, %s5
  %s8 = scalar_select 0, %s7, %s5
  $region1: #{tpu_custom_call.1} parent=0
    #allocation2 [shape = 'u8[512]{0}', space=vmem, size = 0x400, scoped, tag = 'output window, operand 0, single buffered']
    #allocation3 [shape = 's32[1]{0}', space=sflag, size = 0x4, scoped, tag = 'scoped memory for tpu_custom_call.1']
    %9 = vsyncpa [#allocation3], 0
    // Predicated region
    $region2: #{tpu_custom_call.1} parent=1 // pred_check
      _
    $region3: #{tpu_custom_call.1} parent=1 // pred_check_branch
      %11 = sbr.rel (0) target = $region5
    $region4: #{tpu_custom_call.1} parent=1 // pred_region
      _
    $region5: #{tpu_custom_call.1} parent=1 // pred_fallthru
      _
    // Predicated region
    $region6: #{tpu_custom_call.1} parent=1 // pred_check
      _
    $region7: #{tpu_custom_call.1} parent=1 // pred_check_branch
      %13 = sbr.rel (0) target = $region9
    $region8: #{tpu_custom_call.1} parent=1 // pred_region
      _
    $region9: #{tpu_custom_call.1} parent=1 // pred_fallthru
      _
    // Predicated region
    $region10: #{tpu_custom_call.1} parent=1 // pred_check
      _
    $region11: #{tpu_custom_call.1} parent=1 // pred_check_branch
      %15 = sbr.rel (0) target = $region13
    $region12: #{tpu_custom_call.1} parent=1 // pred_region
      _
    $region13: #{tpu_custom_call.1} parent=1 // pred_fallthru
      _
    // Predicated region
    $region14: #{tpu_custom_call.1} parent=1 // pred_check
      _
    $region15: #{tpu_custom_call.1} parent=1 // pred_check_branch
      %17 = sbr.rel (0) target = $region17
    $region16: #{tpu_custom_call.1} parent=1 // pred_region
      _
    $region17: #{tpu_custom_call.1} parent=1 // pred_fallthru
      _
    %v18 = vld [vmem:[%s0] sm:$0xff]
    %v19 = vld [vmem:[%s1] sm:$0xff]
    %v20 = vld [vmem:[%s2] sm:$0x1]
    %v21 = vld [vmem:[%s3] sm:$0xff]
    %v22 = vld [vmem:[%s3 + $0x8] sm:$0xff]
    %v23 = vld [vmem:[%s3 + $0x10] sm:$0xff]
    %v24 = vld [vmem:[%s3 + $0x18] sm:$0xff]
    %v25 = vld [vmem:[%s3 + $0x20] sm:$0xff]
    %v26 = vld [vmem:[%s3 + $0x28] sm:$0xff]
    %v27 = vld [vmem:[%s3 + $0x30] sm:$0xff]
    %v28 = vld [vmem:[%s3 + $0x38] sm:$0xff]
    %v29 = vlaneseq
    %v30 = vand.u32 %v29, 127
    %31 = vset.pattern.permute.xlu0 0
    %32 = vperm.xlu0 %31, %v19
    %v33 = vpop.permute.xlu0 %32
    %vm34 = vcmp.eq.s32.totalorder %v30, %v33
    %v35 = vsel %vm34, 1, 0
    %v36 = vcvt.s32.f32 %v35
    %v38 = vlaneseq
    %v39 = vshrl.u32 %v38, 7
    %v40 = vsub.s32 0, %v39
    %v41 = vrot.slane %v20, %v40
    %v43 = vsub.f32 %v41, %v18
    %v44 = vmul.f32 %v43, %v36
    %vm45 = vcmask 130048
    %v46 = vsel %vm45, %v44, 0.0
    %47 = vadd.xlane.f32.xlu0 %v46
    %v48 = vpop.xlane.xlu0 %47
    %v49 = vmul.f32 %v21, 0.1
    %v50 = vmul.f32 %v22, 0.1
    %v51 = vmul.f32 %v23, 0.1
    %v52 = vmul.f32 %v24, 0.1
    %v53 = vmul.f32 %v25, 0.1
    %v54 = vmul.f32 %v26, 0.1
    %v55 = vmul.f32 %v27, 0.1
    %v56 = vmul.f32 %v28, 0.1
    %v57 = vadd.f32 %v18, %v49
    %v58 = vadd.f32 %v18, %v50
    %v59 = vadd.f32 %v18, %v51
    %v60 = vadd.f32 %v18, %v52
    %v61 = vadd.f32 %v18, %v53
    %v62 = vadd.f32 %v18, %v54
    %v63 = vadd.f32 %v18, %v55
    %v64 = vadd.f32 %v18, %v56
    %v65 = vsel %vm45, %v57, -inf
    %66 = vmax.xlane.f32.xlu0 %v65
    %v67 = vpop.xlane.xlu0 %66
    %v68 = vsel %vm45, %v58, -inf
    %69 = vmax.xlane.f32.xlu0 %v68
    %v70 = vpop.xlane.xlu0 %69
    %v71 = vsel %vm45, %v59, -inf
    %72 = vmax.xlane.f32.xlu0 %v71
    %v73 = vpop.xlane.xlu0 %72
    %v74 = vsel %vm45, %v60, -inf
    %75 = vmax.xlane.f32.xlu0 %v74
    %v76 = vpop.xlane.xlu0 %75
    %v77 = vsel %vm45, %v61, -inf
    %78 = vmax.xlane.f32.xlu0 %v77
    %v79 = vpop.xlane.xlu0 %78
    %v80 = vsel %vm45, %v62, -inf
    %81 = vmax.xlane.f32.xlu0 %v80
    %v82 = vpop.xlane.xlu0 %81
    %v83 = vsel %vm45, %v63, -inf
    %84 = vmax.xlane.f32.xlu0 %v83
    %v85 = vpop.xlane.xlu0 %84
    %v86 = vsel %vm45, %v64, -inf
    %87 = vmax.xlane.f32.xlu0 %v86
    %v88 = vpop.xlane.xlu0 %87
    %vm89 = vcmp.eq.f32.partialorder %v57, %v67
    %vm90 = vcmp.eq.f32.partialorder %v58, %v70
    %vm91 = vcmp.eq.f32.partialorder %v59, %v73
    %vm92 = vcmp.eq.f32.partialorder %v60, %v76
    %vm93 = vcmp.eq.f32.partialorder %v61, %v79
    %vm94 = vcmp.eq.f32.partialorder %v62, %v82
    %vm95 = vcmp.eq.f32.partialorder %v63, %v85
    %vm96 = vcmp.eq.f32.partialorder %v64, %v88
    %v97 = vsel %vm89, -3e+38, %v57
    %v98 = vsel %vm90, -3e+38, %v58
    %v99 = vsel %vm91, -3e+38, %v59
    %v100 = vsel %vm92, -3e+38, %v60
    %v101 = vsel %vm93, -3e+38, %v61
    %v102 = vsel %vm94, -3e+38, %v62
    %v103 = vsel %vm95, -3e+38, %v63
    %v104 = vsel %vm96, -3e+38, %v64
    %v105 = vsel %vm45, %v97, -inf
    %106 = vmax.xlane.f32.xlu0 %v105
    %v107 = vpop.xlane.xlu0 %106
    %v108 = vsel %vm45, %v98, -inf
    %109 = vmax.xlane.f32.xlu0 %v108
    %v110 = vpop.xlane.xlu0 %109
    %v111 = vsel %vm45, %v99, -inf
    %112 = vmax.xlane.f32.xlu0 %v111
    %v113 = vpop.xlane.xlu0 %112
    %v114 = vsel %vm45, %v100, -inf
    %115 = vmax.xlane.f32.xlu0 %v114
    %v116 = vpop.xlane.xlu0 %115
    %v117 = vsel %vm45, %v101, -inf
    %118 = vmax.xlane.f32.xlu0 %v117
    %v119 = vpop.xlane.xlu0 %118
    %v120 = vsel %vm45, %v102, -inf
    %121 = vmax.xlane.f32.xlu0 %v120
    %v122 = vpop.xlane.xlu0 %121
    %v123 = vsel %vm45, %v103, -inf
    %124 = vmax.xlane.f32.xlu0 %v123
    %v125 = vpop.xlane.xlu0 %124
    %v126 = vsel %vm45, %v104, -inf
    %127 = vmax.xlane.f32.xlu0 %v126
    %v128 = vpop.xlane.xlu0 %127
    %vm129 = vcmp.eq.f32.partialorder %v97, %v107
    %vm130 = vcmp.eq.f32.partialorder %v98, %v110
    %vm131 = vcmp.eq.f32.partialorder %v99, %v113
    %vm132 = vcmp.eq.f32.partialorder %v100, %v116
    %vm133 = vcmp.eq.f32.partialorder %v101, %v119
    %vm134 = vcmp.eq.f32.partialorder %v102, %v122
    %vm135 = vcmp.eq.f32.partialorder %v103, %v125
    %vm136 = vcmp.eq.f32.partialorder %v104, %v128
    %v137 = vsel %vm129, -3e+38, %v97
    %v138 = vsel %vm130, -3e+38, %v98
    %v139 = vsel %vm131, -3e+38, %v99
    %v140 = vsel %vm132, -3e+38, %v100
    %v141 = vsel %vm133, -3e+38, %v101
    %v142 = vsel %vm134, -3e+38, %v102
    %v143 = vsel %vm135, -3e+38, %v103
    %v144 = vsel %vm136, -3e+38, %v104
    %v145 = vsel %vm45, %v137, -inf
    %146 = vmax.xlane.f32.xlu0 %v145
    %v147 = vpop.xlane.xlu0 %146
    %v148 = vsel %vm45, %v138, -inf
    %149 = vmax.xlane.f32.xlu0 %v148
    %v150 = vpop.xlane.xlu0 %149
    %v151 = vsel %vm45, %v139, -inf
    %152 = vmax.xlane.f32.xlu0 %v151
    %v153 = vpop.xlane.xlu0 %152
    %v154 = vsel %vm45, %v140, -inf
    %155 = vmax.xlane.f32.xlu0 %v154
    %v156 = vpop.xlane.xlu0 %155
    %v157 = vsel %vm45, %v141, -inf
    %158 = vmax.xlane.f32.xlu0 %v157
    %v159 = vpop.xlane.xlu0 %158
    %v160 = vsel %vm45, %v142, -inf
    %161 = vmax.xlane.f32.xlu0 %v160
    %v162 = vpop.xlane.xlu0 %161
    %v163 = vsel %vm45, %v143, -inf
    %164 = vmax.xlane.f32.xlu0 %v163
    %v165 = vpop.xlane.xlu0 %164
    %v166 = vsel %vm45, %v144, -inf
    %167 = vmax.xlane.f32.xlu0 %v166
    %v168 = vpop.xlane.xlu0 %167
    %v169 = vadd.f32 %v147, %v150
    %v170 = vadd.f32 %v169, %v153
    %v171 = vadd.f32 %v170, %v156
    %v172 = vadd.f32 %v171, %v159
    %v173 = vadd.f32 %v172, %v162
    %v174 = vadd.f32 %v173, %v165
    %v175 = vadd.f32 %v174, %v168
    %v176 = vmul.f32 %v175, 0.125
    %v177 = vadd.f32 %v48, %v176
    %v178 = vmul.f32 %v177, 30.0
    %v179 = vmax.f32 %v178, 0.0
    %v180 = vrot.slane %v179, 4
    %v181 = vadd.f32 %v179, %v180
    %v182 = vrot.slane %v181, 2
    %v183 = vadd.f32 %v181, %v182
    %v184 = vrot.slane %v183, 1
    %v185 = vadd.f32 %v183, %v184
    %v186 = vmul.f32 %v185, 0.125
    %vm187 = vcmask 0
    %188 = vst.msk [vmem:[#allocation2] sm:$0x1] %vm187, %v186
    // Predicated region
    $region18: #{tpu_custom_call.1} parent=1 // pred_check
      _
    $region19: #{tpu_custom_call.1} parent=1 // pred_check_branch
      %190 = sbr.rel (0) target = $region21
    $region20: #{tpu_custom_call.1} parent=1 // pred_region
      %s192 = ssub.s32 16, 16
      %193 = vsyncadd [#allocation3], %s192
      %s195 = sshll.u32 [#allocation2], 4
      %s196 = int_to_ptr.vmem [resolvable:$true] %s195
      %198 = dma.vmem_to_hbm [thread:$0]  %s196, 16, %s4, [#allocation3]
    $region21: #{tpu_custom_call.1} parent=1 // pred_fallthru
      _
    // Predicated region
    $region22: #{tpu_custom_call.1} parent=1 // pred_check
      _
    $region23: #{tpu_custom_call.1} parent=1 // pred_check_branch
      %200 = sbr.rel (0) target = $region25
    $region24: #{tpu_custom_call.1} parent=1 // pred_region
      %201 = dma.done [#allocation3], 16
    $region25: #{tpu_custom_call.1} parent=1 // pred_fallthru
      _
    %202 = vsyncpa [#allocation3], 1

</llo_original>
